<compile_context>
chip_gen: v7x
topology: tpu7x:2x2x1
jax: 0.10.0
libtpu: 0.0.40
codegen_flags: <defaults>
</compile_context>

<pallas_src>
import functools

import jax
import jax.numpy as jnp
from jax.experimental import pallas as pl
from jax.experimental.pallas import tpu as pltpu

LANE = 128     # vreg lane width
SUBLANE = 8    # f32 sublane count


def _round_up(x, m):
    return (x + m - 1) // m * m


# ---------------------------------------------------------------------------
# Fused Pallas kernel: chained (h @ W_l + b_l) with ReLU on all but last layer
# ---------------------------------------------------------------------------
def _fused_mlp_kernel(x_ref, *refs, num_layers):
    """refs = (w_0, b_0, w_1, b_1, ..., w_{L-1}, b_{L-1}, o_ref).

    x_ref : (TM, K0) bf16 activation tile
    w_l   : (K_l, N_l) bf16 (whole weight, resident in VMEM)
    b_l   : (1, N_l)  f32
    o_ref : (TM, N_{L-1}) f32
    """
    o_ref = refs[-1]
    h = x_ref[...]                                        # bf16 (TM, K0)
    for l in range(num_layers):
        w = refs[2 * l][...]
        b = refs[2 * l + 1][...]
        y = jnp.dot(h, w, preferred_element_type=jnp.float32) + b
        if l < num_layers - 1:
            y = jnp.maximum(y, 0.0)                       # ReLU (hidden layers)
            h = y.astype(jnp.bfloat16)                    # bf16 for next MXU pass
        else:
            h = y                                         # logits stay f32
    o_ref[...] = h.astype(o_ref.dtype)


# ---------------------------------------------------------------------------
# Parameter init (PyTorch-like shapes) and lane-padded/bf16 preparation
# ---------------------------------------------------------------------------
def init_mlp_params(key, input_shape, num_class, layer_widths):
    """List of (W, b); W is (in_f, out_f) so y = x @ W + b. Last entry = output layer."""
    in_f = 1
    for d in input_shape:
        in_f *= int(d)
    params = []
    for out_f in list(layer_widths) + [num_class]:
        key, kw, kb = jax.random.split(key, 3)
        bound = 1.0 / (in_f ** 0.5)
        w = jax.random.uniform(kw, (in_f, out_f), jnp.float32, -bound, bound)
        b = jax.random.uniform(kb, (out_f,), jnp.float32, -bound, bound)
        params.append((w, b))
        in_f = out_f
    return params


def prepare_padded_params(params, in_features):
    """Zero-pad every layer to lane-aligned widths; weights -> bf16, biases -> f32 (1, N)."""
    padded = []
    prev_true, prev_pad = in_features, _round_up(in_features, LANE)
    for (w, b) in params:
        out_f = w.shape[1]
        out_pad = _round_up(out_f, LANE)
        w_p = jnp.zeros((prev_pad, out_pad), jnp.bfloat16)
        w_p = w_p.at[:prev_true, :out_f].set(w.astype(jnp.bfloat16))
        b_p = jnp.zeros((1, out_pad), jnp.float32)
        b_p = b_p.at[0, :out_f].set(b.astype(jnp.float32))
        padded.append((w_p, b_p))
        prev_true, prev_pad = out_f, out_pad
    return padded


# ---------------------------------------------------------------------------
# Forward: flatten -> single fused pallas_call -> slice logits
# ---------------------------------------------------------------------------
def mlp_net_forward(x_nchw, padded_params, in_features, num_class):
    B = x_nchw.shape[0]
    x = x_nchw.reshape(B, -1).astype(jnp.float32)         # nn.Flatten()

    k0 = _round_up(in_features, LANE)
    tm = LANE if B >= LANE else _round_up(B, SUBLANE)      # M tile (sublane-aligned)
    b_pad = _round_up(B, tm)
    grid = (b_pad // tm,)

    # Zero-pad batch rows and K columns; cast activations to bf16 for the MXU.
    x_p = jnp.zeros((b_pad, k0), jnp.bfloat16).at[:B, :in_features].set(
        x.astype(jnp.bfloat16))

    num_layers = len(padded_params)
    out_pad = padded_params[-1][0].shape[1]

    in_specs = [pl.BlockSpec((tm, k0), lambda i: (i, 0))]
    flat_wb = []
    for (w_p, b_p) in padded_params:
        in_specs.append(pl.BlockSpec(w_p.shape, lambda i: (0, 0)))   # resident weights
        in_specs.append(pl.BlockSpec(b_p.shape, lambda i: (0, 0)))
        flat_wb.extend([w_p, b_p])

    out = pl.pallas_call(
        functools.partial(_fused_mlp_kernel, num_layers=num_layers),
        out_shape=jax.ShapeDtypeStruct((b_pad, out_pad), jnp.float32),
        grid_spec=pltpu.PrefetchScalarGridSpec(
            num_scalar_prefetch=0,
            grid=grid,
            in_specs=in_specs,
            out_specs=pl.BlockSpec((tm, out_pad), lambda i: (i, 0)),
        ),
        compiler_params=pltpu.CompilerParams(
            dimension_semantics=("parallel",),   # batch tiles split across TCs on v7x
        ),
    )(x_p, *flat_wb)

    return out[:B, :num_class]


# ---------------------------------------------------------------------------
# References for the sanity check
# ---------------------------------------------------------------------------
def mlp_net_reference_bf16(x_nchw, params):
    """Mirrors the kernel numerics: bf16 matmul operands, f32 accumulate/bias/ReLU."""
    B = x_nchw.shape[0]
    x = x_nchw.reshape(B, -1).astype(jnp.float32)
    for li, (w, b) in enumerate(params):
        y = jnp.dot(x.astype(jnp.bfloat16), w.astype(jnp.bfloat16),
                    preferred_element_type=jnp.float32) + b
        x = jnp.maximum(y, 0.0) if li < len(params) - 1 else y
    return x


def mlp_net_reference_f32(x_nchw, params):
    B = x_nchw.shape[0]
    x = x_nchw.reshape(B, -1)
    for (w, b) in params[:-1]:
        x = jnp.maximum(x @ w + b, 0.0)
    w_out, b_out = params[-1]
    return x @ w_out + b_out


if __name__ == "__main__":
    key = jax.random.PRNGKey(0)

    # x: (num_samp, num_channel, height, width)
    batch, channels, height, width = 2, 4, 16, 16
    input_shape = (channels, height, width)
    layer_widths = [32, 32]
    num_class = 10
    in_features = channels * height * width

    key, kx, kp = jax.random.split(key, 3)
    x = jax.random.normal(kx, (batch, channels, height, width), jnp.float32)
    params = init_mlp_params(kp, input_shape, num_class, layer_widths)
    padded_params = prepare_padded_params(params, in_features)

    logits = mlp_net_forward(x, padded_params, in_features, num_class)
    logits = jax.block_until_ready(logits)
    assert logits.shape == (batch, num_class), logits.shape

    ref_bf16 = mlp_net_reference_bf16(x, params)
    assert jnp.allclose(logits, ref_bf16, atol=1e-2, rtol=1e-2), (
        "mismatch vs bf16 reference: max abs err "
        f"{float(jnp.max(jnp.abs(logits - ref_bf16)))}"
    )
    ref_f32 = mlp_net_reference_f32(x, params)
    assert jnp.allclose(logits, ref_f32, atol=1e-1, rtol=1e-1), (
        "mismatch vs f32 reference: max abs err "
        f"{float(jnp.max(jnp.abs(logits - ref_f32)))}"
    )

    print("KERNEL_OK")
</pallas_src>

<mosaic_0001>
module attributes {stable_mosaic.version = 11 : i64} {
  func.func @_fused_mlp_kernel(%arg0: i32, %arg1: memref<8x1024xbf16, #tpu.memory_space<vmem>>, %arg2: memref<1024x128xbf16, #tpu.memory_space<vmem>>, %arg3: memref<1x128xf32, #tpu.memory_space<vmem>>, %arg4: memref<128x128xbf16, #tpu.memory_space<vmem>>, %arg5: memref<1x128xf32, #tpu.memory_space<vmem>>, %arg6: memref<128x128xbf16, #tpu.memory_space<vmem>>, %arg7: memref<1x128xf32, #tpu.memory_space<vmem>>, %arg8: memref<8x128xf32, #tpu.memory_space<vmem>>) attributes {dimension_semantics = [#tpu.dimension_semantics<parallel>], iteration_bounds = array<i64: 1>, scalar_prefetch = 0 : i64, scratch_operands = 0 : i64, tpu.core_type = #tpu.core_type<tc>, window_params = [{transform_indices = @transform_0, window_bounds = array<i64: 8, 1024>}, {pipeline_mode = #tpu.pipeline_mode<synchronous>, transform_indices = @transform_1, window_bounds = array<i64: 1024, 128>}, {pipeline_mode = #tpu.pipeline_mode<synchronous>, transform_indices = @transform_2, window_bounds = array<i64: 1, 128>}, {pipeline_mode = #tpu.pipeline_mode<synchronous>, transform_indices = @transform_3, window_bounds = array<i64: 128, 128>}, {pipeline_mode = #tpu.pipeline_mode<synchronous>, transform_indices = @transform_4, window_bounds = array<i64: 1, 128>}, {pipeline_mode = #tpu.pipeline_mode<synchronous>, transform_indices = @transform_5, window_bounds = array<i64: 128, 128>}, {pipeline_mode = #tpu.pipeline_mode<synchronous>, transform_indices = @transform_6, window_bounds = array<i64: 1, 128>}, {transform_indices = @transform_7, window_bounds = array<i64: 8, 128>}]} {
    %c0 = arith.constant 0 : index
    %c0_0 = arith.constant 0 : index
    %0 = vector.load %arg1[%c0, %c0_0] : memref<8x1024xbf16, #tpu.memory_space<vmem>>, vector<8x1024xbf16>
    %c0_1 = arith.constant 0 : index
    %c0_2 = arith.constant 0 : index
    %1 = vector.load %arg2[%c0_1, %c0_2] : memref<1024x128xbf16, #tpu.memory_space<vmem>>, vector<1024x128xbf16>
    %c0_3 = arith.constant 0 : index
    %c0_4 = arith.constant 0 : index
    %2 = vector.load %arg3[%c0_3, %c0_4] : memref<1x128xf32, #tpu.memory_space<vmem>>, vector<1x128xf32>
    %cst = arith.constant dense<0.000000e+00> : vector<8x128xf32>
    %3 = tpu.matmul %0, %1, %cst {dimension_numbers = #tpu.dot_dimension_numbers<[1], [0], [0], [1], [0, 0, 1, 1], [], []>} : vector<8x1024xbf16>, vector<1024x128xbf16>, vector<8x128xf32> -> vector<8x128xf32>
    %4 = vector.broadcast %2 : vector<1x128xf32> to vector<8x128xf32>
    %5 = arith.addf %3, %4 : vector<8x128xf32>
    %cst_5 = arith.constant 0.000000e+00 : f32
    %6 = vector.broadcast %cst_5 : f32 to vector<8x128xf32>
    %7 = arith.maximumf %5, %6 : vector<8x128xf32>
    %8 = arith.truncf %7 : vector<8x128xf32> to vector<8x128xbf16>
    %c0_6 = arith.constant 0 : index
    %c0_7 = arith.constant 0 : index
    %9 = vector.load %arg4[%c0_6, %c0_7] : memref<128x128xbf16, #tpu.memory_space<vmem>>, vector<128x128xbf16>
    %c0_8 = arith.constant 0 : index
    %c0_9 = arith.constant 0 : index
    %10 = vector.load %arg5[%c0_8, %c0_9] : memref<1x128xf32, #tpu.memory_space<vmem>>, vector<1x128xf32>
    %cst_10 = arith.constant dense<0.000000e+00> : vector<8x128xf32>
    %11 = tpu.matmul %8, %9, %cst_10 {dimension_numbers = #tpu.dot_dimension_numbers<[1], [0], [0], [1], [0, 0, 1, 1], [], []>} : vector<8x128xbf16>, vector<128x128xbf16>, vector<8x128xf32> -> vector<8x128xf32>
    %12 = vector.broadcast %10 : vector<1x128xf32> to vector<8x128xf32>
    %13 = arith.addf %11, %12 : vector<8x128xf32>
    %cst_11 = arith.constant 0.000000e+00 : f32
    %14 = vector.broadcast %cst_11 : f32 to vector<8x128xf32>
    %15 = arith.maximumf %13, %14 : vector<8x128xf32>
    %16 = arith.truncf %15 : vector<8x128xf32> to vector<8x128xbf16>
    %c0_12 = arith.constant 0 : index
    %c0_13 = arith.constant 0 : index
    %17 = vector.load %arg6[%c0_12, %c0_13] : memref<128x128xbf16, #tpu.memory_space<vmem>>, vector<128x128xbf16>
    %c0_14 = arith.constant 0 : index
    %c0_15 = arith.constant 0 : index
    %18 = vector.load %arg7[%c0_14, %c0_15] : memref<1x128xf32, #tpu.memory_space<vmem>>, vector<1x128xf32>
    %cst_16 = arith.constant dense<0.000000e+00> : vector<8x128xf32>
    %19 = tpu.matmul %16, %17, %cst_16 {dimension_numbers = #tpu.dot_dimension_numbers<[1], [0], [0], [1], [0, 0, 1, 1], [], []>} : vector<8x128xbf16>, vector<128x128xbf16>, vector<8x128xf32> -> vector<8x128xf32>
    %20 = vector.broadcast %18 : vector<1x128xf32> to vector<8x128xf32>
    %21 = arith.addf %19, %20 : vector<8x128xf32>
    %c0_17 = arith.constant 0 : index
    %c0_18 = arith.constant 0 : index
    %22 = vector.load %arg8[%c0_17, %c0_18] : memref<8x128xf32, #tpu.memory_space<vmem>>, vector<8x128xf32>
    tpu.vector_store %arg8[%c0_17, %c0_18], %21 {strides = array<i32>} : memref<8x128xf32, #tpu.memory_space<vmem>>, vector<8x128xf32>,
    return
  }
  func.func @transform_0(%arg0: i32) -> (i32, i32) {
    %c0_i32 = arith.constant 0 : i32
    %c0_i32_0 = arith.constant 0 : i32
    return %arg0, %c0_i32 : i32, i32
  }
  func.func @transform_1(%arg0: i32) -> (i32, i32) {
    %c0_i32 = arith.constant 0 : i32
    %c0_i32_0 = arith.constant 0 : i32
    %c0_i32_1 = arith.constant 0 : i32
    return %c0_i32, %c0_i32_0 : i32, i32
  }
  func.func @transform_2(%arg0: i32) -> (i32, i32) {
    %c0_i32 = arith.constant 0 : i32
    %c0_i32_0 = arith.constant 0 : i32
    %c0_i32_1 = arith.constant 0 : i32
    return %c0_i32, %c0_i32_0 : i32, i32
  }
  func.func @transform_3(%arg0: i32) -> (i32, i32) {
    %c0_i32 = arith.constant 0 : i32
    %c0_i32_0 = arith.constant 0 : i32
    %c0_i32_1 = arith.constant 0 : i32
    return %c0_i32, %c0_i32_0 : i32, i32
  }
  func.func @transform_4(%arg0: i32) -> (i32, i32) {
    %c0_i32 = arith.constant 0 : i32
    %c0_i32_0 = arith.constant 0 : i32
    %c0_i32_1 = arith.constant 0 : i32
    return %c0_i32, %c0_i32_0 : i32, i32
  }
  func.func @transform_5(%arg0: i32) -> (i32, i32) {
    %c0_i32 = arith.constant 0 : i32
    %c0_i32_0 = arith.constant 0 : i32
    %c0_i32_1 = arith.constant 0 : i32
    return %c0_i32, %c0_i32_0 : i32, i32
  }
  func.func @transform_6(%arg0: i32) -> (i32, i32) {
    %c0_i32 = arith.constant 0 : i32
    %c0_i32_0 = arith.constant 0 : i32
    %c0_i32_1 = arith.constant 0 : i32
    return %c0_i32, %c0_i32_0 : i32, i32
  }
  func.func @transform_7(%arg0: i32) -> (i32, i32) {
    %c0_i32 = arith.constant 0 : i32
    %c0_i32_0 = arith.constant 0 : i32
    return %arg0, %c0_i32 : i32, i32
  }
}

</mosaic_0001>

<llo_original>
// kernel: tpu_custom_call.1
$region0: #{tpu_custom_call.1}
  #allocation0 [shape = 'u32[]', space=smem, size = 0x4, offset = 0x4, fixed_abs, tag = 'smem constant byte address 0x4 - core index']
  #allocation1 [shape = 'u32[144,128]{1,0:T(1,128)}', space=vmem, size = 0x12000, scoped, tag = 'internal scratch']
  %s0 = inlined_call_operand.hbm [shape: bf16[8,1024], index: 0, kind: input, shape index: {}]
  %s1 = inlined_call_operand.hbm [shape: bf16[1024,128], index: 1, kind: input, shape index: {}]
  %s2 = inlined_call_operand.vmem [shape: f32[1,128], index: 2, kind: input, shape index: {}]
  %s3 = inlined_call_operand.hbm [shape: bf16[128,128], index: 3, kind: input, shape index: {}]
  %s4 = inlined_call_operand.vmem [shape: f32[1,128], index: 4, kind: input, shape index: {}]
  %s5 = inlined_call_operand.hbm [shape: bf16[128,128], index: 5, kind: input, shape index: {}]
  %s6 = inlined_call_operand.vmem [shape: f32[1,128], index: 6, kind: input, shape index: {}]
  %s7 = inlined_call_operand.hbm [shape: f32[8,128], index: 7, kind: output, shape index: {}]
  %s8 = sld [smem:[#allocation0]]
  $region54: #{tpu_custom_call.1} parent=0
    _
  %s10 = ssub.s32 1, %s8
  %s11 = scalar_select 0, %s10, %s8
  $region1: #{tpu_custom_call.1} parent=0
    #allocation2 [shape = 'u8[16384]{0}', space=vmem, size = 0x4000, scoped, tag = 'input window, operand 0, single buffered']
    #allocation3 [shape = 's32[1]{0}', space=sflag, size = 0x4, scoped, tag = 'scoped memory for tpu_custom_call.1']
    #allocation4 [shape = 's32[1]{0}', space=sflag, size = 0x4, scoped, tag = 'scoped memory for tpu_custom_call.1']
    #allocation5 [shape = 'u8[262144]{0}', space=vmem, size = 0x40000, scoped, tag = 'input window, operand 1, single buffered']
    #allocation6 [shape = 's32[1]{0}', space=sflag, size = 0x4, scoped, tag = 'scoped memory for tpu_custom_call.1']
    #allocation7 [shape = 'u8[32768]{0}', space=vmem, size = 0x8000, scoped, tag = 'input window, operand 3, single buffered']
    #allocation8 [shape = 'u8[32768]{0}', space=vmem, size = 0x8000, scoped, tag = 'input window, operand 5, single buffered']
    #allocation9 [shape = 's32[1]{0}', space=sflag, size = 0x4, scoped, tag = 'scoped memory for tpu_custom_call.1']
    #allocation10 [shape = 'u8[4096]{0}', space=vmem, size = 0x1000, scoped, tag = 'output window, operand 0, single buffered']
    %12 = vsyncpa [#allocation3], 0
    %13 = vsyncpa [#allocation6], 0
    %14 = vsyncpa [#allocation9], 0
    %15 = vsyncpa [#allocation4], 0
    // Predicated region
    $region2: #{tpu_custom_call.1} parent=1 // pred_check
      _
    $region3: #{tpu_custom_call.1} parent=1 // pred_check_branch
      %17 = sbr.rel (0) target = $region5
    $region4: #{tpu_custom_call.1} parent=1 // pred_region
      %s19 = ssub.s32 512, 512
      %20 = vsyncadd [#allocation3], %s19
      %s22 = sshll.u32 [#allocation2], 4
      %s23 = int_to_ptr.vmem [resolvable:$true] %s22
      %25 = dma.hbm_to_vmem [thread:$0]  %s0, 512, %s23, [#allocation3]
    $region5: #{tpu_custom_call.1} parent=1 // pred_fallthru
      _
    // Predicated region
    $region6: #{tpu_custom_call.1} parent=1 // pred_check
      _
    $region7: #{tpu_custom_call.1} parent=1 // pred_check_branch
      %27 = sbr.rel (0) target = $region9
    $region8: #{tpu_custom_call.1} parent=1 // pred_region
      %s29 = ssub.s32 8192, 8192
      %30 = vsyncadd [#allocation6], %s29
      %s31 = sshll.u32 [#allocation5], 4
      %s32 = int_to_ptr.vmem [resolvable:$true] %s31
      %37 = dma.hbm_to_vmem [thread:$0]  %s1, 8192, %s32, [#allocation6], 64, 64, 4
    $region9: #{tpu_custom_call.1} parent=1 // pred_fallthru
      _
    // Predicated region
    $region10: #{tpu_custom_call.1} parent=1 // pred_check
      _
    $region11: #{tpu_custom_call.1} parent=1 // pred_check_branch
      %39 = sbr.rel (0) target = $region13
    $region12: #{tpu_custom_call.1} parent=1 // pred_region
      _
    $region13: #{tpu_custom_call.1} parent=1 // pred_fallthru
      _
    // Predicated region
    $region14: #{tpu_custom_call.1} parent=1 // pred_check
      _
    $region15: #{tpu_custom_call.1} parent=1 // pred_check_branch
      %41 = sbr.rel (0) target = $region17
    $region16: #{tpu_custom_call.1} parent=1 // pred_region
      %s43 = ssub.s32 1024, 1024
      %44 = vsyncadd [#allocation6], %s43
      %s45 = sshll.u32 [#allocation7], 4
      %s46 = int_to_ptr.vmem [resolvable:$true] %s45
      %51 = dma.hbm_to_vmem [thread:$0]  %s3, 1024, %s46, [#allocation6], 64, 64, 4
    $region17: #{tpu_custom_call.1} parent=1 // pred_fallthru
      _
    // Predicated region
    $region18: #{tpu_custom_call.1} parent=1 // pred_check
      _
    $region19: #{tpu_custom_call.1} parent=1 // pred_check_branch
      %53 = sbr.rel (0) target = $region21
    $region20: #{tpu_custom_call.1} parent=1 // pred_region
      _
    $region21: #{tpu_custom_call.1} parent=1 // pred_fallthru
      _
    // Predicated region
    $region22: #{tpu_custom_call.1} parent=1 // pred_check
      _
    $region23: #{tpu_custom_call.1} parent=1 // pred_check_branch
      %55 = sbr.rel (0) target = $region25
    $region24: #{tpu_custom_call.1} parent=1 // pred_region
      %s57 = ssub.s32 1024, 1024
      %58 = vsyncadd [#allocation9], %s57
      %s59 = sshll.u32 [#allocation8], 4
      %s60 = int_to_ptr.vmem [resolvable:$true] %s59
      %65 = dma.hbm_to_vmem [thread:$0]  %s5, 1024, %s60, [#allocation9], 64, 64, 4
    $region25: #{tpu_custom_call.1} parent=1 // pred_fallthru
      _
    // Predicated region
    $region26: #{tpu_custom_call.1} parent=1 // pred_check
      _
    $region27: #{tpu_custom_call.1} parent=1 // pred_check_branch
      %67 = sbr.rel (0) target = $region29
    $region28: #{tpu_custom_call.1} parent=1 // pred_region
      _
    $region29: #{tpu_custom_call.1} parent=1 // pred_fallthru
      _
    // Predicated region
    $region30: #{tpu_custom_call.1} parent=1 // pred_check
      _
    $region31: #{tpu_custom_call.1} parent=1 // pred_check_branch
      %69 = sbr.rel (0) target = $region33
    $region32: #{tpu_custom_call.1} parent=1 // pred_region
      %70 = dma.done [#allocation3], 512
    $region33: #{tpu_custom_call.1} parent=1 // pred_fallthru
      _
    // Predicated region
    $region34: #{tpu_custom_call.1} parent=1 // pred_check
      _
    $region35: #{tpu_custom_call.1} parent=1 // pred_check_branch
      %72 = sbr.rel (0) target = $region37
    $region36: #{tpu_custom_call.1} parent=1 // pred_region
      %73 = dma.done [#allocation6], 8192
    $region37: #{tpu_custom_call.1} parent=1 // pred_fallthru
      _
    // Predicated region
    $region38: #{tpu_custom_call.1} parent=1 // pred_check
      _
    $region39: #{tpu_custom_call.1} parent=1 // pred_check_branch
      %75 = sbr.rel (0) target = $region41
    $region40: #{tpu_custom_call.1} parent=1 // pred_region
      %76 = dma.done [#allocation6], 1024
    $region41: #{tpu_custom_call.1} parent=1 // pred_fallthru
      _
    // Predicated region
    $region42: #{tpu_custom_call.1} parent=1 // pred_check
      _
    $region43: #{tpu_custom_call.1} parent=1 // pred_check_branch
      %78 = sbr.rel (0) target = $region45
    $region44: #{tpu_custom_call.1} parent=1 // pred_region
      %79 = dma.done [#allocation9], 1024
    $region45: #{tpu_custom_call.1} parent=1 // pred_fallthru
      _
    %v81 = vld [vmem:[#allocation2] sm:$0xff]
    %v82 = vld [vmem:[#allocation2 + $0x8] sm:$0xff]
    %v83 = vld [vmem:[#allocation2 + $0x10] sm:$0xff]
    %v84 = vld [vmem:[#allocation2 + $0x18] sm:$0xff]
    %v85 = vld [vmem:[#allocation5] sm:$0xf]
    %v86 = vld [vmem:[#allocation5 + $0x4] sm:$0xf]
    %v87 = vld [vmem:[#allocation5 + $0x8] sm:$0xf]
    %v88 = vld [vmem:[#allocation5 + $0xc] sm:$0xf]
    %v89 = vld [vmem:[#allocation5 + $0x10] sm:$0xf]
    %v90 = vld [vmem:[#allocation5 + $0x14] sm:$0xf]
    %v91 = vld [vmem:[#allocation5 + $0x18] sm:$0xf]
    %v92 = vld [vmem:[#allocation5 + $0x1c] sm:$0xf]
    %v93 = vld [vmem:[#allocation5 + $0x20] sm:$0xf]
    %v94 = vld [vmem:[#allocation5 + $0x24] sm:$0xf]
    %v95 = vld [vmem:[#allocation5 + $0x28] sm:$0xf]
    %v96 = vld [vmem:[#allocation5 + $0x2c] sm:$0xf]
    %v97 = vld [vmem:[#allocation5 + $0x30] sm:$0xf]
    %v98 = vld [vmem:[#allocation5 + $0x34] sm:$0xf]
    %v99 = vld [vmem:[#allocation5 + $0x38] sm:$0xf]
    %v100 = vld [vmem:[#allocation5 + $0x3c] sm:$0xf]
    %v101 = vld [vmem:[#allocation5 + $0x40] sm:$0xf]
    %v102 = vld [vmem:[#allocation5 + $0x44] sm:$0xf]
    %v103 = vld [vmem:[#allocation5 + $0x48] sm:$0xf]
    %v104 = vld [vmem:[#allocation5 + $0x4c] sm:$0xf]
    %v105 = vld [vmem:[#allocation5 + $0x50] sm:$0xf]
    %v106 = vld [vmem:[#allocation5 + $0x54] sm:$0xf]
    %v107 = vld [vmem:[#allocation5 + $0x58] sm:$0xf]
    %v108 = vld [vmem:[#allocation5 + $0x5c] sm:$0xf]
    %v109 = vld [vmem:[#allocation5 + $0x60] sm:$0xf]
    %v110 = vld [vmem:[#allocation5 + $0x64] sm:$0xf]
    %v111 = vld [vmem:[#allocation5 + $0x68] sm:$0xf]
    %v112 = vld [vmem:[#allocation5 + $0x6c] sm:$0xf]
    %v113 = vld [vmem:[#allocation5 + $0x70] sm:$0xf]
    %v114 = vld [vmem:[#allocation5 + $0x74] sm:$0xf]
    %v115 = vld [vmem:[#allocation5 + $0x78] sm:$0xf]
    %v116 = vld [vmem:[#allocation5 + $0x7c] sm:$0xf]
    %v117 = vld [vmem:[#allocation5 + $0x80] sm:$0xf]
    %v118 = vld [vmem:[#allocation5 + $0x84] sm:$0xf]
    %v119 = vld [vmem:[#allocation5 + $0x88] sm:$0xf]
    %v120 = vld [vmem:[#allocation5 + $0x8c] sm:$0xf]
    %v121 = vld [vmem:[#allocation5 + $0x90] sm:$0xf]
    %v122 = vld [vmem:[#allocation5 + $0x94] sm:$0xf]
    %v123 = vld [vmem:[#allocation5 + $0x98] sm:$0xf]
    %v124 = vld [vmem:[#allocation5 + $0x9c] sm:$0xf]
    %v125 = vld [vmem:[#allocation5 + $0xa0] sm:$0xf]
    %v126 = vld [vmem:[#allocation5 + $0xa4] sm:$0xf]
    %v127 = vld [vmem:[#allocation5 + $0xa8] sm:$0xf]
    %v128 = vld [vmem:[#allocation5 + $0xac] sm:$0xf]
    %v129 = vld [vmem:[#allocation5 + $0xb0] sm:$0xf]
    %v130 = vld [vmem:[#allocation5 + $0xb4] sm:$0xf]
    %v131 = vld [vmem:[#allocation5 + $0xb8] sm:$0xf]
    %v132 = vld [vmem:[#allocation5 + $0xbc] sm:$0xf]
    %v133 = vld [vmem:[#allocation5 + $0xc0] sm:$0xf]
    %v134 = vld [vmem:[#allocation5 + $0xc4] sm:$0xf]
    %v135 = vld [vmem:[#allocation5 + $0xc8] sm:$0xf]
    %v136 = vld [vmem:[#allocation5 + $0xcc] sm:$0xf]
    %v137 = vld [vmem:[#allocation5 + $0xd0] sm:$0xf]
    %v138 = vld [vmem:[#allocation5 + $0xd4] sm:$0xf]
    %v139 = vld [vmem:[#allocation5 + $0xd8] sm:$0xf]
    %v140 = vld [vmem:[#allocation5 + $0xdc] sm:$0xf]
    %v141 = vld [vmem:[#allocation5 + $0xe0] sm:$0xf]
    %v142 = vld [vmem:[#allocation5 + $0xe4] sm:$0xf]
    %v143 = vld [vmem:[#allocation5 + $0xe8] sm:$0xf]
    %v144 = vld [vmem:[#allocation5 + $0xec] sm:$0xf]
    %v145 = vld [vmem:[#allocation5 + $0xf0] sm:$0xf]
    %v146 = vld [vmem:[#allocation5 + $0xf4] sm:$0xf]
    %v147 = vld [vmem:[#allocation5 + $0xf8] sm:$0xf]
    %v148 = vld [vmem:[#allocation5 + $0xfc] sm:$0xf]
    %v149 = vld [vmem:[#allocation5 + $0x100] sm:$0xf]
    %v150 = vld [vmem:[#allocation5 + $0x104] sm:$0xf]
    %v151 = vld [vmem:[#allocation5 + $0x108] sm:$0xf]
    %v152 = vld [vmem:[#allocation5 + $0x10c] sm:$0xf]
    %v153 = vld [vmem:[#allocation5 + $0x110] sm:$0xf]
    %v154 = vld [vmem:[#allocation5 + $0x114] sm:$0xf]
    %v155 = vld [vmem:[#allocation5 + $0x118] sm:$0xf]
    %v156 = vld [vmem:[#allocation5 + $0x11c] sm:$0xf]
    %v157 = vld [vmem:[#allocation5 + $0x120] sm:$0xf]
    %v158 = vld [vmem:[#allocation5 + $0x124] sm:$0xf]
    %v159 = vld [vmem:[#allocation5 + $0x128] sm:$0xf]
    %v160 = vld [vmem:[#allocation5 + $0x12c] sm:$0xf]
    %v161 = vld [vmem:[#allocation5 + $0x130] sm:$0xf]
    %v162 = vld [vmem:[#allocation5 + $0x134] sm:$0xf]
    %v163 = vld [vmem:[#allocation5 + $0x138] sm:$0xf]
    %v164 = vld [vmem:[#allocation5 + $0x13c] sm:$0xf]
    %v165 = vld [vmem:[#allocation5 + $0x140] sm:$0xf]
    %v166 = vld [vmem:[#allocation5 + $0x144] sm:$0xf]
    %v167 = vld [vmem:[#allocation5 + $0x148] sm:$0xf]
    %v168 = vld [vmem:[#allocation5 + $0x14c] sm:$0xf]
    %v169 = vld [vmem:[#allocation5 + $0x150] sm:$0xf]
    %v170 = vld [vmem:[#allocation5 + $0x154] sm:$0xf]
    %v171 = vld [vmem:[#allocation5 + $0x158] sm:$0xf]
    %v172 = vld [vmem:[#allocation5 + $0x15c] sm:$0xf]
    %v173 = vld [vmem:[#allocation5 + $0x160] sm:$0xf]
    %v174 = vld [vmem:[#allocation5 + $0x164] sm:$0xf]
    %v175 = vld [vmem:[#allocation5 + $0x168] sm:$0xf]
    %v176 = vld [vmem:[#allocation5 + $0x16c] sm:$0xf]
    %v177 = vld [vmem:[#allocation5 + $0x170] sm:$0xf]
    %v178 = vld [vmem:[#allocation5 + $0x174] sm:$0xf]
    %v179 = vld [vmem:[#allocation5 + $0x178] sm:$0xf]
    %v180 = vld [vmem:[#allocation5 + $0x17c] sm:$0xf]
    %v181 = vld [vmem:[#allocation5 + $0x180] sm:$0xf]
    %v182 = vld [vmem:[#allocation5 + $0x184] sm:$0xf]
    %v183 = vld [vmem:[#allocation5 + $0x188] sm:$0xf]
    %v184 = vld [vmem:[#allocation5 + $0x18c] sm:$0xf]
    %v185 = vld [vmem:[#allocation5 + $0x190] sm:$0xf]
    %v186 = vld [vmem:[#allocation5 + $0x194] sm:$0xf]
    %v187 = vld [vmem:[#allocation5 + $0x198] sm:$0xf]
    %v188 = vld [vmem:[#allocation5 + $0x19c] sm:$0xf]
    %v189 = vld [vmem:[#allocation5 + $0x1a0] sm:$0xf]
    %v190 = vld [vmem:[#allocation5 + $0x1a4] sm:$0xf]
    %v191 = vld [vmem:[#allocation5 + $0x1a8] sm:$0xf]
    %v192 = vld [vmem:[#allocation5 + $0x1ac] sm:$0xf]
    %v193 = vld [vmem:[#allocation5 + $0x1b0] sm:$0xf]
    %v194 = vld [vmem:[#allocation5 + $0x1b4] sm:$0xf]
    %v195 = vld [vmem:[#allocation5 + $0x1b8] sm:$0xf]
    %v196 = vld [vmem:[#allocation5 + $0x1bc] sm:$0xf]
    %v197 = vld [vmem:[#allocation5 + $0x1c0] sm:$0xf]
    %v198 = vld [vmem:[#allocation5 + $0x1c4] sm:$0xf]
    %v199 = vld [vmem:[#allocation5 + $0x1c8] sm:$0xf]
    %v200 = vld [vmem:[#allocation5 + $0x1cc] sm:$0xf]
    %v201 = vld [vmem:[#allocation5 + $0x1d0] sm:$0xf]
    %v202 = vld [vmem:[#allocation5 + $0x1d4] sm:$0xf]
    %v203 = vld [vmem:[#allocation5 + $0x1d8] sm:$0xf]
    %v204 = vld [vmem:[#allocation5 + $0x1dc] sm:$0xf]
    %v205 = vld [vmem:[#allocation5 + $0x1e0] sm:$0xf]
    %v206 = vld [vmem:[#allocation5 + $0x1e4] sm:$0xf]
    %v207 = vld [vmem:[#allocation5 + $0x1e8] sm:$0xf]
    %v208 = vld [vmem:[#allocation5 + $0x1ec] sm:$0xf]
    %v209 = vld [vmem:[#allocation5 + $0x1f0] sm:$0xf]
    %v210 = vld [vmem:[#allocation5 + $0x1f4] sm:$0xf]
    %v211 = vld [vmem:[#allocation5 + $0x1f8] sm:$0xf]
    %v212 = vld [vmem:[#allocation5 + $0x1fc] sm:$0xf]
    %v213 = vld [vmem:[%s2] sm:$0x1]
    %v215 = vlaneseq
    %v216 = vshrl.u32 %v215, 7
    %v217 = vsub.s32 0, %v216
    %v218 = vrot.slane %v213, %v217
    %v224 = vunpack.c.l.b16 %v81
    %v225 = vunpack.c.h.b16 %v81
    %v226 = vunpack.c.l.b16 %v82
    %v227 = vunpack.c.h.b16 %v82
    %v228 = vunpack.c.l.b16 %v83
    %v229 = vunpack.c.h.b16 %v83
    %v230 = vunpack.c.l.b16 %v84
    %v231 = vunpack.c.h.b16 %v84
    %v232 = vpack.c.b16 %v224, %v224
    %v233 = vpack.c.b16 %v225, %v225
    %v234 = vpack.c.b16 %v226, %v226
    %v235 = vpack.c.b16 %v227, %v227
    %v236 = vpack.c.b16 %v228, %v228
    %v237 = vpack.c.b16 %v229, %v229
    %v238 = vpack.c.b16 %v230, %v230
    %v239 = vpack.c.b16 %v231, %v231
    %v376 = vunpack.c.l.b16 %v85
    %v377 = vunpack.c.l.b16 %v86
    %v378 = vunpack.c.l.b16 %v87
    %v379 = vunpack.c.l.b16 %v88
    %v380 = vunpack.c.l.b16 %v89
    %v381 = vunpack.c.l.b16 %v90
    %v382 = vunpack.c.l.b16 %v91
    %v383 = vunpack.c.l.b16 %v92
    %v384 = vunpack.c.l.b16 %v93
    %v385 = vunpack.c.l.b16 %v94
    %v386 = vunpack.c.l.b16 %v95
    %v387 = vunpack.c.l.b16 %v96
    %v388 = vunpack.c.l.b16 %v97
    %v389 = vunpack.c.l.b16 %v98
    %v390 = vunpack.c.l.b16 %v99
    %v391 = vunpack.c.l.b16 %v100
    %v392 = vunpack.c.l.b16 %v101
    %v393 = vunpack.c.l.b16 %v102
    %v394 = vunpack.c.l.b16 %v103
    %v395 = vunpack.c.l.b16 %v104
    %v396 = vunpack.c.l.b16 %v105
    %v397 = vunpack.c.l.b16 %v106
    %v398 = vunpack.c.l.b16 %v107
    %v399 = vunpack.c.l.b16 %v108
    %v400 = vunpack.c.l.b16 %v109
    %v401 = vunpack.c.l.b16 %v110
    %v402 = vunpack.c.l.b16 %v111
    %v403 = vunpack.c.l.b16 %v112
    %v404 = vunpack.c.l.b16 %v113
    %v405 = vunpack.c.l.b16 %v114
    %v406 = vunpack.c.l.b16 %v115
    %v407 = vunpack.c.l.b16 %v116
    %v408 = vunpack.c.l.b16 %v117
    %v409 = vunpack.c.l.b16 %v118
    %v410 = vunpack.c.l.b16 %v119
    %v411 = vunpack.c.l.b16 %v120
    %v412 = vunpack.c.l.b16 %v121
    %v413 = vunpack.c.l.b16 %v122
    %v414 = vunpack.c.l.b16 %v123
    %v415 = vunpack.c.l.b16 %v124
    %v416 = vunpack.c.l.b16 %v125
    %v417 = vunpack.c.l.b16 %v126
    %v418 = vunpack.c.l.b16 %v127
    %v419 = vunpack.c.l.b16 %v128
    %v420 = vunpack.c.l.b16 %v129
    %v421 = vunpack.c.l.b16 %v130
    %v422 = vunpack.c.l.b16 %v131
    %v423 = vunpack.c.l.b16 %v132
    %v424 = vunpack.c.l.b16 %v133
    %v425 = vunpack.c.l.b16 %v134
    %v426 = vunpack.c.l.b16 %v135
    %v427 = vunpack.c.l.b16 %v136
    %v428 = vunpack.c.l.b16 %v137
    %v429 = vunpack.c.l.b16 %v138
    %v430 = vunpack.c.l.b16 %v139
    %v431 = vunpack.c.l.b16 %v140
    %v432 = vunpack.c.l.b16 %v141
    %v433 = vunpack.c.l.b16 %v142
    %v434 = vunpack.c.l.b16 %v143
    %v435 = vunpack.c.l.b16 %v144
    %v436 = vunpack.c.l.b16 %v145
    %v437 = vunpack.c.l.b16 %v146
    %v438 = vunpack.c.l.b16 %v147
    %v439 = vunpack.c.l.b16 %v148
    %v440 = vunpack.c.l.b16 %v149
    %v441 = vunpack.c.l.b16 %v150
    %v442 = vunpack.c.l.b16 %v151
    %v443 = vunpack.c.l.b16 %v152
    %v444 = vunpack.c.l.b16 %v153
    %v445 = vunpack.c.l.b16 %v154
    %v446 = vunpack.c.l.b16 %v155
    %v447 = vunpack.c.l.b16 %v156
    %v448 = vunpack.c.l.b16 %v157
    %v449 = vunpack.c.l.b16 %v158
    %v450 = vunpack.c.l.b16 %v159
    %v451 = vunpack.c.l.b16 %v160
    %v452 = vunpack.c.l.b16 %v161
    %v453 = vunpack.c.l.b16 %v162
    %v454 = vunpack.c.l.b16 %v163
    %v455 = vunpack.c.l.b16 %v164
    %v456 = vunpack.c.l.b16 %v165
    %v457 = vunpack.c.l.b16 %v166
    %v458 = vunpack.c.l.b16 %v167
    %v459 = vunpack.c.l.b16 %v168
    %v460 = vunpack.c.l.b16 %v169
    %v461 = vunpack.c.l.b16 %v170
    %v462 = vunpack.c.l.b16 %v171
    %v463 = vunpack.c.l.b16 %v172
    %v464 = vunpack.c.l.b16 %v173
    %v465 = vunpack.c.l.b16 %v174
    %v466 = vunpack.c.l.b16 %v175
    %v467 = vunpack.c.l.b16 %v176
    %v468 = vunpack.c.l.b16 %v177
    %v469 = vunpack.c.l.b16 %v178
    %v470 = vunpack.c.l.b16 %v179
    %v471 = vunpack.c.l.b16 %v180
    %v472 = vunpack.c.l.b16 %v181
    %v473 = vunpack.c.l.b16 %v182
    %v474 = vunpack.c.l.b16 %v183
    %v475 = vunpack.c.l.b16 %v184
    %v476 = vunpack.c.l.b16 %v185
    %v477 = vunpack.c.l.b16 %v186
    %v478 = vunpack.c.l.b16 %v187
    %v479 = vunpack.c.l.b16 %v188
    %v480 = vunpack.c.l.b16 %v189
    %v481 = vunpack.c.l.b16 %v190
    %v482 = vunpack.c.l.b16 %v191
    %v483 = vunpack.c.l.b16 %v192
    %v484 = vunpack.c.l.b16 %v193
    %v485 = vunpack.c.l.b16 %v194
    %v486 = vunpack.c.l.b16 %v195
    %v487 = vunpack.c.l.b16 %v196
    %v488 = vunpack.c.l.b16 %v197
    %v489 = vunpack.c.l.b16 %v198
    %v490 = vunpack.c.l.b16 %v199
    %v491 = vunpack.c.l.b16 %v200
    %v492 = vunpack.c.l.b16 %v201
    %v493 = vunpack.c.l.b16 %v202
    %v494 = vunpack.c.l.b16 %v203
    %v495 = vunpack.c.l.b16 %v204
    %v496 = vunpack.c.l.b16 %v205
    %v497 = vunpack.c.l.b16 %v206
    %v498 = vunpack.c.l.b16 %v207
    %v499 = vunpack.c.l.b16 %v208
    %v500 = vunpack.c.l.b16 %v209
    %v501 = vunpack.c.l.b16 %v210
    %v502 = vunpack.c.l.b16 %v211
    %v503 = vunpack.c.l.b16 %v212
    %v504 = vpack.c.b16 %v377, %v376
    %v505 = vpack.c.b16 %v379, %v378
    %v506 = vpack.c.b16 %v381, %v380
    %v507 = vpack.c.b16 %v383, %v382
    %v508 = vpack.c.b16 %v385, %v384
    %v509 = vpack.c.b16 %v387, %v386
    %v510 = vpack.c.b16 %v389, %v388
    %v511 = vpack.c.b16 %v391, %v390
    %v512 = vpack.c.b16 %v393, %v392
    %v513 = vpack.c.b16 %v395, %v394
    %v514 = vpack.c.b16 %v397, %v396
    %v515 = vpack.c.b16 %v399, %v398
    %v516 = vpack.c.b16 %v401, %v400
    %v517 = vpack.c.b16 %v403, %v402
    %v518 = vpack.c.b16 %v405, %v404
    %v519 = vpack.c.b16 %v407, %v406
    %v520 = vpack.c.b16 %v409, %v408
    %v521 = vpack.c.b16 %v411, %v410
    %v522 = vpack.c.b16 %v413, %v412
    %v523 = vpack.c.b16 %v415, %v414
    %v524 = vpack.c.b16 %v417, %v416
    %v525 = vpack.c.b16 %v419, %v418
    %v526 = vpack.c.b16 %v421, %v420
    %v527 = vpack.c.b16 %v423, %v422
    %v528 = vpack.c.b16 %v425, %v424
    %v529 = vpack.c.b16 %v427, %v426
    %v530 = vpack.c.b16 %v429, %v428
    %v531 = vpack.c.b16 %v431, %v430
    %v532 = vpack.c.b16 %v433, %v432
    %v533 = vpack.c.b16 %v435, %v434
    %v534 = vpack.c.b16 %v437, %v436
    %v535 = vpack.c.b16 %v439, %v438
    %v536 = vpack.c.b16 %v441, %v440
    %v537 = vpack.c.b16 %v443, %v442
    %v538 = vpack.c.b16 %v445, %v444
    %v539 = vpack.c.b16 %v447, %v446
    %v540 = vpack.c.b16 %v449, %v448
    %v541 = vpack.c.b16 %v451, %v450
    %v542 = vpack.c.b16 %v453, %v452
    %v543 = vpack.c.b16 %v455, %v454
    %v544 = vpack.c.b16 %v457, %v456
    %v545 = vpack.c.b16 %v459, %v458
    %v546 = vpack.c.b16 %v461, %v460
    %v547 = vpack.c.b16 %v463, %v462
    %v548 = vpack.c.b16 %v465, %v464
    %v549 = vpack.c.b16 %v467, %v466
    %v550 = vpack.c.b16 %v469, %v468
    %v551 = vpack.c.b16 %v471, %v470
    %v552 = vpack.c.b16 %v473, %v472
    %v553 = vpack.c.b16 %v475, %v474
    %v554 = vpack.c.b16 %v477, %v476
    %v555 = vpack.c.b16 %v479, %v478
    %v556 = vpack.c.b16 %v481, %v480
    %v557 = vpack.c.b16 %v483, %v482
    %v558 = vpack.c.b16 %v485, %v484
    %v559 = vpack.c.b16 %v487, %v486
    %v560 = vpack.c.b16 %v489, %v488
    %v561 = vpack.c.b16 %v491, %v490
    %v562 = vpack.c.b16 %v493, %v492
    %v563 = vpack.c.b16 %v495, %v494
    %v564 = vpack.c.b16 %v497, %v496
    %v565 = vpack.c.b16 %v499, %v498
    %v566 = vpack.c.b16 %v501, %v500
    %v567 = vpack.c.b16 %v503, %v502
    %632 = vmatprep.subr.bf16.mxu0 0
    %633 = vmatpush1.bf16.msra.mxu0 %v504
    %634 = vmatprep.subr.bf16.mxu0 0
    %635 = vmatpush1.bf16.msra.mxu0 %v505
    %636 = vmatprep.subr.bf16.mxu0 0
    %637 = vmatpush1.bf16.msra.mxu0 %v506
    %638 = vmatprep.subr.bf16.mxu0 0
    %639 = vmatpush1.bf16.msra.mxu0 %v507
    %640 = vmatprep.subr.bf16.mxu0 0
    %641 = vmatpush1.bf16.msra.mxu0 %v508
    %642 = vmatprep.subr.bf16.mxu0 0
    %643 = vmatpush1.bf16.msra.mxu0 %v509
    %644 = vmatprep.subr.bf16.mxu0 0
    %645 = vmatpush1.bf16.msra.mxu0 %v510
    %646 = vmatprep.subr.bf16.mxu0 0
    %647 = vmatpush1.bf16.msra.mxu0 %v511
    %648 = vmatprep.subr.bf16.mxu0 0
    %649 = vmatpush1.bf16.msra.mxu0 %v512
    %650 = vmatprep.subr.bf16.mxu0 0
    %651 = vmatpush1.bf16.msra.mxu0 %v513
    %652 = vmatprep.subr.bf16.mxu0 0
    %653 = vmatpush1.bf16.msra.mxu0 %v514
    %654 = vmatprep.subr.bf16.mxu0 0
    %655 = vmatpush1.bf16.msra.mxu0 %v515
    %656 = vmatprep.subr.bf16.mxu0 0
    %657 = vmatpush1.bf16.msra.mxu0 %v516
    %658 = vmatprep.subr.bf16.mxu0 0
    %659 = vmatpush1.bf16.msra.mxu0 %v517
    %660 = vmatprep.subr.bf16.mxu0 0
    %661 = vmatpush1.bf16.msra.mxu0 %v518
    %662 = vmatprep.subr.bf16.mxu0 0
    %663 = vmatpush1.bf16.msra.mxu0 %v519
    %664 = vmatprep.mubr.bf16.mxu0 %v233
    %665 = vmatmul.mubr.bf16.gmra.mrb[0].mxu0 %v232
    %v666 = vpop.f32.mrb[0].mxu0
    %v667 = vadd.f32 %v218, %v666
    %v668 = vpop.f32.mrb[0].mxu0
    %v669 = vpop.f32.mrb[0].mxu0
    %v670 = vpop.f32.mrb[0].mxu0
    %671 = vdwg.mxu0
    %672 = vmatprep.subr.bf16.mxu0 0
    %673 = vmatpush1.bf16.msra.mxu0 %v520
    %674 = vmatprep.subr.bf16.mxu0 0
    %675 = vmatpush1.bf16.msra.mxu0 %v521
    %676 = vmatprep.subr.bf16.mxu0 0
    %677 = vmatpush1.bf16.msra.mxu0 %v522
    %678 = vmatprep.subr.bf16.mxu0 0
    %679 = vmatpush1.bf16.msra.mxu0 %v523
    %680 = vmatprep.subr.bf16.mxu0 0
    %681 = vmatpush1.bf16.msra.mxu0 %v524
    %682 = vmatprep.subr.bf16.mxu0 0
    %683 = vmatpush1.bf16.msra.mxu0 %v525
    %684 = vmatprep.subr.bf16.mxu0 0
    %685 = vmatpush1.bf16.msra.mxu0 %v526
    %686 = vmatprep.subr.bf16.mxu0 0
    %687 = vmatpush1.bf16.msra.mxu0 %v527
    %688 = vmatprep.subr.bf16.mxu0 0
    %689 = vmatpush1.bf16.msra.mxu0 %v528
    %690 = vmatprep.subr.bf16.mxu0 0
    %691 = vmatpush1.bf16.msra.mxu0 %v529
    %692 = vmatprep.subr.bf16.mxu0 0
    %693 = vmatpush1.bf16.msra.mxu0 %v530
    %694 = vmatprep.subr.bf16.mxu0 0
    %695 = vmatpush1.bf16.msra.mxu0 %v531
    %696 = vmatprep.subr.bf16.mxu0 0
    %697 = vmatpush1.bf16.msra.mxu0 %v532
    %698 = vmatprep.subr.bf16.mxu0 0
    %699 = vmatpush1.bf16.msra.mxu0 %v533
    %700 = vmatprep.subr.bf16.mxu0 0
    %701 = vmatpush1.bf16.msra.mxu0 %v534
    %702 = vmatprep.subr.bf16.mxu0 0
    %703 = vmatpush1.bf16.msra.mxu0 %v535
    %704 = vmatprep.mubr.bf16.mxu0 %v235
    %705 = vmatmul.mubr.bf16.gmra.mrb[0].mxu0 %v234
    %v706 = vpop.f32.mrb[0].mxu0
    %v707 = vadd.f32 %v667, %v706
    %v708 = vpop.f32.mrb[0].mxu0
    %v709 = vpop.f32.mrb[0].mxu0
    %v710 = vpop.f32.mrb[0].mxu0
    %711 = vdwg.mxu0
    %712 = vmatprep.subr.bf16.mxu0 0
    %713 = vmatpush1.bf16.msra.mxu0 %v536
    %714 = vmatprep.subr.bf16.mxu0 0
    %715 = vmatpush1.bf16.msra.mxu0 %v537
    %716 = vmatprep.subr.bf16.mxu0 0
    %717 = vmatpush1.bf16.msra.mxu0 %v538
    %718 = vmatprep.subr.bf16.mxu0 0
    %719 = vmatpush1.bf16.msra.mxu0 %v539
    %720 = vmatprep.subr.bf16.mxu0 0
    %721 = vmatpush1.bf16.msra.mxu0 %v540
    %722 = vmatprep.subr.bf16.mxu0 0
    %723 = vmatpush1.bf16.msra.mxu0 %v541
    %724 = vmatprep.subr.bf16.mxu0 0
    %725 = vmatpush1.bf16.msra.mxu0 %v542
    %726 = vmatprep.subr.bf16.mxu0 0
    %727 = vmatpush1.bf16.msra.mxu0 %v543
    %728 = vmatprep.subr.bf16.mxu0 0
    %729 = vmatpush1.bf16.msra.mxu0 %v544
    %730 = vmatprep.subr.bf16.mxu0 0
    %731 = vmatpush1.bf16.msra.mxu0 %v545
    %732 = vmatprep.subr.bf16.mxu0 0
    %733 = vmatpush1.bf16.msra.mxu0 %v546
    %734 = vmatprep.subr.bf16.mxu0 0
    %735 = vmatpush1.bf16.msra.mxu0 %v547
    %736 = vmatprep.subr.bf16.mxu0 0
    %737 = vmatpush1.bf16.msra.mxu0 %v548
    %738 = vmatprep.subr.bf16.mxu0 0
    %739 = vmatpush1.bf16.msra.mxu0 %v549
    %740 = vmatprep.subr.bf16.mxu0 0
    %741 = vmatpush1.bf16.msra.mxu0 %v550
    %742 = vmatprep.subr.bf16.mxu0 0
    %743 = vmatpush1.bf16.msra.mxu0 %v551
    %744 = vmatprep.mubr.bf16.mxu0 %v237
    %745 = vmatmul.mubr.bf16.gmra.mrb[0].mxu0 %v236
    %v746 = vpop.f32.mrb[0].mxu0
    %v747 = vadd.f32 %v707, %v746
    %v748 = vpop.f32.mrb[0].mxu0
    %v749 = vpop.f32.mrb[0].mxu0
    %v750 = vpop.f32.mrb[0].mxu0
    %751 = vdwg.mxu0
    %752 = vmatprep.subr.bf16.mxu0 0
    %753 = vmatpush1.bf16.msra.mxu0 %v552
    %754 = vmatprep.subr.bf16.mxu0 0
    %755 = vmatpush1.bf16.msra.mxu0 %v553
    %756 = vmatprep.subr.bf16.mxu0 0
    %757 = vmatpush1.bf16.msra.mxu0 %v554
    %758 = vmatprep.subr.bf16.mxu0 0
    %759 = vmatpush1.bf16.msra.mxu0 %v555
    %760 = vmatprep.subr.bf16.mxu0 0
    %761 = vmatpush1.bf16.msra.mxu0 %v556
    %762 = vmatprep.subr.bf16.mxu0 0
    %763 = vmatpush1.bf16.msra.mxu0 %v557
    %764 = vmatprep.subr.bf16.mxu0 0
    %765 = vmatpush1.bf16.msra.mxu0 %v558
    %766 = vmatprep.subr.bf16.mxu0 0
    %767 = vmatpush1.bf16.msra.mxu0 %v559
    %768 = vmatprep.subr.bf16.mxu0 0
    %769 = vmatpush1.bf16.msra.mxu0 %v560
    %770 = vmatprep.subr.bf16.mxu0 0
    %771 = vmatpush1.bf16.msra.mxu0 %v561
    %772 = vmatprep.subr.bf16.mxu0 0
    %773 = vmatpush1.bf16.msra.mxu0 %v562
    %774 = vmatprep.subr.bf16.mxu0 0
    %775 = vmatpush1.bf16.msra.mxu0 %v563
    %776 = vmatprep.subr.bf16.mxu0 0
    %777 = vmatpush1.bf16.msra.mxu0 %v564
    %778 = vmatprep.subr.bf16.mxu0 0
    %779 = vmatpush1.bf16.msra.mxu0 %v565
    %780 = vmatprep.subr.bf16.mxu0 0
    %781 = vmatpush1.bf16.msra.mxu0 %v566
    %782 = vmatprep.subr.bf16.mxu0 0
    %783 = vmatpush1.bf16.msra.mxu0 %v567
    %784 = vmatprep.mubr.bf16.mxu0 %v239
    %785 = vmatmul.mubr.bf16.gmra.mrb[0].mxu0 %v238
    %v786 = vpop.f32.mrb[0].mxu0
    %v787 = vadd.f32 %v747, %v786
    %v788 = vpop.f32.mrb[0].mxu0
    %v789 = vpop.f32.mrb[0].mxu0
    %v790 = vpop.f32.mrb[0].mxu0
    %791 = vdwg.mxu0
    %v792 = vmax.f32 %v787, 0.0
    %v793 = vpack.c.bf16 %v792, %v792
    %v794 = vld [vmem:[#allocation7] sm:$0xf]
    %v795 = vld [vmem:[#allocation7 + $0x4] sm:$0xf]
    %v796 = vld [vmem:[#allocation7 + $0x8] sm:$0xf]
    %v797 = vld [vmem:[#allocation7 + $0xc] sm:$0xf]
    %v798 = vld [vmem:[#allocation7 + $0x10] sm:$0xf]
    %v799 = vld [vmem:[#allocation7 + $0x14] sm:$0xf]
    %v800 = vld [vmem:[#allocation7 + $0x18] sm:$0xf]
    %v801 = vld [vmem:[#allocation7 + $0x1c] sm:$0xf]
    %v802 = vld [vmem:[#allocation7 + $0x20] sm:$0xf]
    %v803 = vld [vmem:[#allocation7 + $0x24] sm:$0xf]
    %v804 = vld [vmem:[#allocation7 + $0x28] sm:$0xf]
    %v805 = vld [vmem:[#allocation7 + $0x2c] sm:$0xf]
    %v806 = vld [vmem:[#allocation7 + $0x30] sm:$0xf]
    %v807 = vld [vmem:[#allocation7 + $0x34] sm:$0xf]
    %v808 = vld [vmem:[#allocation7 + $0x38] sm:$0xf]
    %v809 = vld [vmem:[#allocation7 + $0x3c] sm:$0xf]
    %v810 = vld [vmem:[%s4] sm:$0x1]
    %v812 = vlaneseq
    %v813 = vshrl.u32 %v812, 7
    %v814 = vsub.s32 0, %v813
    %v815 = vrot.slane %v810, %v814
    %v833 = vunpack.c.l.b16 %v794
    %v834 = vunpack.c.l.b16 %v795
    %v835 = vunpack.c.l.b16 %v796
    %v836 = vunpack.c.l.b16 %v797
    %v837 = vunpack.c.l.b16 %v798
    %v838 = vunpack.c.l.b16 %v799
    %v839 = vunpack.c.l.b16 %v800
    %v840 = vunpack.c.l.b16 %v801
    %v841 = vunpack.c.l.b16 %v802
    %v842 = vunpack.c.l.b16 %v803
    %v843 = vunpack.c.l.b16 %v804
    %v844 = vunpack.c.l.b16 %v805
    %v845 = vunpack.c.l.b16 %v806
    %v846 = vunpack.c.l.b16 %v807
    %v847 = vunpack.c.l.b16 %v808
    %v848 = vunpack.c.l.b16 %v809
    %v849 = vpack.c.b16 %v834, %v833
    %v850 = vpack.c.b16 %v836, %v835
    %v851 = vpack.c.b16 %v838, %v837
    %v852 = vpack.c.b16 %v840, %v839
    %v853 = vpack.c.b16 %v842, %v841
    %v854 = vpack.c.b16 %v844, %v843
    %v855 = vpack.c.b16 %v846, %v845
    %v856 = vpack.c.b16 %v848, %v847
    %865 = vmatprep.subr.bf16.mxu0 0
    %866 = vmatpush1.bf16.msra.mxu0 %v849
    %867 = vmatprep.subr.bf16.mxu0 0
    %868 = vmatpush1.bf16.msra.mxu0 %v850
    %869 = vmatprep.subr.bf16.mxu0 0
    %870 = vmatpush1.bf16.msra.mxu0 %v851
    %871 = vmatprep.subr.bf16.mxu0 0
    %872 = vmatpush1.bf16.msra.mxu0 %v852
    %873 = vmatprep.subr.bf16.mxu0 0
    %874 = vmatpush1.bf16.msra.mxu0 %v853
    %875 = vmatprep.subr.bf16.mxu0 0
    %876 = vmatpush1.bf16.msra.mxu0 %v854
    %877 = vmatprep.subr.bf16.mxu0 0
    %878 = vmatpush1.bf16.msra.mxu0 %v855
    %879 = vmatprep.subr.bf16.mxu0 0
    %880 = vmatpush1.bf16.msra.mxu0 %v856
    %881 = vmatprep.subr.bf16.mxu0 0
    %882 = vmatpush1.bf16.msra.mxu0 0
    %883 = vmatprep.subr.bf16.mxu0 0
    %884 = vmatpush1.bf16.msra.mxu0 0
    %885 = vmatprep.subr.bf16.mxu0 0
    %886 = vmatpush1.bf16.msra.mxu0 0
    %887 = vmatprep.subr.bf16.mxu0 0
    %888 = vmatpush1.bf16.msra.mxu0 0
    %889 = vmatprep.subr.bf16.mxu0 0
    %890 = vmatpush1.bf16.msra.mxu0 0
    %891 = vmatprep.subr.bf16.mxu0 0
    %892 = vmatpush1.bf16.msra.mxu0 0
    %893 = vmatprep.subr.bf16.mxu0 0
    %894 = vmatpush1.bf16.msra.mxu0 0
    %895 = vmatprep.subr.bf16.mxu0 0
    %896 = vmatpush1.bf16.msra.mxu0 0
    %897 = vmatprep.mubr.bf16.mxu0 0
    %898 = vmatmul.mubr.bf16.gmra.mrb[0].mxu0 %v793
    %v899 = vpop.f32.mrb[0].mxu0
    %v900 = vadd.f32 %v815, %v899
    %v901 = vpop.f32.mrb[0].mxu0
    %v902 = vpop.f32.mrb[0].mxu0
    %v903 = vpop.f32.mrb[0].mxu0
    %904 = vdwg.mxu0
    %v905 = vmax.f32 %v900, 0.0
    %v906 = vpack.c.bf16 %v905, %v905
    %v907 = vld [vmem:[#allocation8] sm:$0xf]
    %v908 = vld [vmem:[#allocation8 + $0x4] sm:$0xf]
    %v909 = vld [vmem:[#allocation8 + $0x8] sm:$0xf]
    %v910 = vld [vmem:[#allocation8 + $0xc] sm:$0xf]
    %v911 = vld [vmem:[#allocation8 + $0x10] sm:$0xf]
    %v912 = vld [vmem:[#allocation8 + $0x14] sm:$0xf]
    %v913 = vld [vmem:[#allocation8 + $0x18] sm:$0xf]
    %v914 = vld [vmem:[#allocation8 + $0x1c] sm:$0xf]
    %v915 = vld [vmem:[#allocation8 + $0x20] sm:$0xf]
    %v916 = vld [vmem:[#allocation8 + $0x24] sm:$0xf]
    %v917 = vld [vmem:[#allocation8 + $0x28] sm:$0xf]
    %v918 = vld [vmem:[#allocation8 + $0x2c] sm:$0xf]
    %v919 = vld [vmem:[#allocation8 + $0x30] sm:$0xf]
    %v920 = vld [vmem:[#allocation8 + $0x34] sm:$0xf]
    %v921 = vld [vmem:[#allocation8 + $0x38] sm:$0xf]
    %v922 = vld [vmem:[#allocation8 + $0x3c] sm:$0xf]
    %v923 = vld [vmem:[%s6] sm:$0x1]
    %v925 = vlaneseq
    %v926 = vshrl.u32 %v925, 7
    %v927 = vsub.s32 0, %v926
    %v928 = vrot.slane %v923, %v927
    %v946 = vunpack.c.l.b16 %v907
    %v947 = vunpack.c.l.b16 %v908
    %v948 = vunpack.c.l.b16 %v909
    %v949 = vunpack.c.l.b16 %v910
    %v950 = vunpack.c.l.b16 %v911
    %v951 = vunpack.c.l.b16 %v912
    %v952 = vunpack.c.l.b16 %v913
    %v953 = vunpack.c.l.b16 %v914
    %v954 = vunpack.c.l.b16 %v915
    %v955 = vunpack.c.l.b16 %v916
    %v956 = vunpack.c.l.b16 %v917
    %v957 = vunpack.c.l.b16 %v918
    %v958 = vunpack.c.l.b16 %v919
    %v959 = vunpack.c.l.b16 %v920
    %v960 = vunpack.c.l.b16 %v921
    %v961 = vunpack.c.l.b16 %v922
    %v962 = vpack.c.b16 %v947, %v946
    %v963 = vpack.c.b16 %v949, %v948
    %v964 = vpack.c.b16 %v951, %v950
    %v965 = vpack.c.b16 %v953, %v952
    %v966 = vpack.c.b16 %v955, %v954
    %v967 = vpack.c.b16 %v957, %v956
    %v968 = vpack.c.b16 %v959, %v958
    %v969 = vpack.c.b16 %v961, %v960
    %978 = vmatprep.subr.bf16.mxu0 0
    %979 = vmatpush1.bf16.msra.mxu0 %v962
    %980 = vmatprep.subr.bf16.mxu0 0
    %981 = vmatpush1.bf16.msra.mxu0 %v963
    %982 = vmatprep.subr.bf16.mxu0 0
    %983 = vmatpush1.bf16.msra.mxu0 %v964
    %984 = vmatprep.subr.bf16.mxu0 0
    %985 = vmatpush1.bf16.msra.mxu0 %v965
    %986 = vmatprep.subr.bf16.mxu0 0
    %987 = vmatpush1.bf16.msra.mxu0 %v966
    %988 = vmatprep.subr.bf16.mxu0 0
    %989 = vmatpush1.bf16.msra.mxu0 %v967
    %990 = vmatprep.subr.bf16.mxu0 0
    %991 = vmatpush1.bf16.msra.mxu0 %v968
    %992 = vmatprep.subr.bf16.mxu0 0
    %993 = vmatpush1.bf16.msra.mxu0 %v969
    %994 = vmatprep.subr.bf16.mxu0 0
    %995 = vmatpush1.bf16.msra.mxu0 0
    %996 = vmatprep.subr.bf16.mxu0 0
    %997 = vmatpush1.bf16.msra.mxu0 0
    %998 = vmatprep.subr.bf16.mxu0 0
    %999 = vmatpush1.bf16.msra.mxu0 0
    %1000 = vmatprep.subr.bf16.mxu0 0
    %1001 = vmatpush1.bf16.msra.mxu0 0
    %1002 = vmatprep.subr.bf16.mxu0 0
    %1003 = vmatpush1.bf16.msra.mxu0 0
    %1004 = vmatprep.subr.bf16.mxu0 0
    %1005 = vmatpush1.bf16.msra.mxu0 0
    %1006 = vmatprep.subr.bf16.mxu0 0
    %1007 = vmatpush1.bf16.msra.mxu0 0
    %1008 = vmatprep.subr.bf16.mxu0 0
    %1009 = vmatpush1.bf16.msra.mxu0 0
    %1010 = vmatprep.mubr.bf16.mxu0 0
    %1011 = vmatmul.mubr.bf16.gmra.mrb[0].mxu0 %v906
    %v1012 = vpop.f32.mrb[0].mxu0
    %v1013 = vadd.f32 %v928, %v1012
    %v1014 = vpop.f32.mrb[0].mxu0
    %v1015 = vpop.f32.mrb[0].mxu0
    %v1016 = vpop.f32.mrb[0].mxu0
    %1017 = vdwg.mxu0
    %1018 = vst [vmem:[#allocation10] sm:$0xff] %v1013
    // Predicated region
    $region46: #{tpu_custom_call.1} parent=1 // pred_check
      _
    $region47: #{tpu_custom_call.1} parent=1 // pred_check_branch
      %1020 = sbr.rel (0) target = $region49
    $region48: #{tpu_custom_call.1} parent=1 // pred_region
      %s1022 = ssub.s32 128, 128
      %1023 = vsyncadd [#allocation4], %s1022
      %s1025 = sshll.u32 [#allocation10], 4
      %s1026 = int_to_ptr.vmem [resolvable:$true] %s1025
      %1028 = dma.vmem_to_hbm [thread:$0]  %s1026, 128, %s7, [#allocation4]
    $region49: #{tpu_custom_call.1} parent=1 // pred_fallthru
      _
    // Predicated region
    $region50: #{tpu_custom_call.1} parent=1 // pred_check
      _
    $region51: #{tpu_custom_call.1} parent=1 // pred_check_branch
      %1030 = sbr.rel (0) target = $region53
    $region52: #{tpu_custom_call.1} parent=1 // pred_region
      %1031 = dma.done [#allocation4], 128
    $region53: #{tpu_custom_call.1} parent=1 // pred_fallthru
      _
    %1032 = vsyncpa [#allocation3], 1
    %1033 = vsyncpa [#allocation6], 1
    %1034 = vsyncpa [#allocation9], 1
    %1035 = vsyncpa [#allocation4], 1

</llo_original>
